<compile_context>
chip_gen: v6e
topology: v6e:2x2x1
jax: 0.10.0
libtpu: 0.0.40
codegen_flags: <defaults>
</compile_context>

<pallas_src>
import functools

import numpy as np
import jax
import jax.numpy as jnp
from jax.experimental import pallas as pl
from jax.experimental.pallas import tpu as pltpu


# --------------------------------------------------------------------------- #
# Hardware-introspection helpers (best effort, always safe fallbacks).
# --------------------------------------------------------------------------- #
def _tensorcores_per_chip():
    """TensorCores per chip (v7x=2, v5e/v6e=1).  Defaults to 1 on any doubt."""
    try:
        info = pltpu.get_tpu_info()
        for attr in ("num_cores", "core_count", "cores_per_chip",
                     "num_tensorcores"):
            v = getattr(info, attr, None)
            if isinstance(v, int) and v > 0:
                return v
    except Exception:
        pass
    try:
        v = getattr(jax.devices()[0], "num_cores", None)
        if isinstance(v, int) and v > 0:
            return v
    except Exception:
        pass
    return 1


def _vmem_limit_bytes():
    """Generation-aware VMEM budget: generous on v5e/v6e (128 MiB physical),
    conservative on v7x (64 MiB physical)."""
    try:
        cap = int(pltpu.get_tpu_info().vmem_capacity_bytes)
    except Exception:
        cap = 64 * 1024 * 1024
    return max(32 * 1024 * 1024, min((cap * 3) // 4, 96 * 1024 * 1024))


def _pick_nb(n, num_cores, cin, cout):
    """Batch elements folded per grid step.

    Single-TC chips: fold everything (grid=(1,)).  Multi-core chips: split just
    enough that every core gets a step, but only if the resulting blocks stay
    8-sublane aligned (Mosaic (8,128) block rule)."""
    if num_cores <= 1 or n == 1:
        return n
    for cand in range(n - 1, 0, -1):
        if n % cand:
            continue
        if n // cand < min(num_cores, n):
            continue
        if (cand * cin) % 8 == 0 and (cand * cout) % 8 == 0:
            return cand
    return n  # no aligned split available -> one step (correct, one core idle)


# --------------------------------------------------------------------------- #
# Kernels
# --------------------------------------------------------------------------- #
def _shifted_cols(x, cmask, KW, pad, HWp):
    """Column-shifted + column-masked copies of the whole slab.
    Built once per grid step and shared across batch / kpl / all row taps."""
    cols = []
    for kw in range(KW):
        dw = kw - pad
        if dw == 0:
            cols.append(x)
        else:
            cols.append(pltpu.roll(x, (-dw) % HWp, axis=1) * cmask[kw:kw + 1, :])
    return cols


def _dsc_kernel_vpu(x_ref, cmask_ref, rmask_ref, dww_ref, pwt_ref, pwb_ref,
                    out_ref, *, KH, KW, pad, W, NB, Cin, Cout, kpl):
    """Small-channel path: depthwise + pointwise entirely on the VPU.

    x_ref:    (NB*Cin, HWp)       input slab, batch folded onto sublanes
    cmask_ref:(KW, HWp)           column (w) border masks, f32 {0,1}
    rmask_ref:(KH, HWp)           row (h) border masks, f32 {0,1}
    dww_ref:  (kpl, NB*Cin, KH*KW) depthwise weights, rows tiled over NB
    pwt_ref:  (kpl, Cout, Cin)    pointwise weights split by multiplier
    pwb_ref:  (Cout, 1)           pointwise bias (depthwise bias folded in)
    out_ref:  (NB*Cout, HWp)      output slab (lane-dense stores)
    """
    HWp = x_ref.shape[-1]
    x = x_ref[...].astype(jnp.float32)
    cmask = cmask_ref[...]
    rmask = rmask_ref[...]
    dww = dww_ref[...].astype(jnp.float32)
    pwt = pwt_ref[...].astype(jnp.float32)
    pwb = pwb_ref[...].astype(jnp.float32)

    xdw = _shifted_cols(x, cmask, KW, pad, HWp)

    # Hoisted pointwise columns (Cout, 1), per (multiplier, input channel).
    pw_cols = [[pwt[m, :, c:c + 1] for c in range(Cin)] for m in range(kpl)]

    # Depthwise: separable masks -> per-row partial sums rolled by dh*W.
    deps = []
    for m in range(kpl):
        dep = None
        for kh in range(KH):
            dh = kh - pad
            s = None
            for kw in range(KW):
                t = kh * KW + kw
                term = dww[m, :, t:t + 1] * xdw[kw]
                s = term if s is None else s + term
            if dh != 0:
                s = pltpu.roll(s, (-(dh * W)) % HWp, axis=1) * rmask[kh:kh + 1, :]
            dep = s if dep is None else dep + s
        deps.append(dep)                                   # (NB*Cin, HWp)

    # Pointwise 1x1: broadcast FMAs (tiny channel counts -> MXU not worth it).
    for nb in range(NB):
        acc = None
        for m in range(kpl):
            dep = deps[m]
            for c in range(Cin):
                row = dep[nb * Cin + c:nb * Cin + c + 1, :]      # (1, HWp)
                term = pw_cols[m][c] * row                       # (Cout, HWp)
                acc = term if acc is None else acc + term
        acc = acc + pwb
        out_ref[pl.ds(nb * Cout, Cout), :] = acc.astype(out_ref.dtype)


def _dsc_kernel_mxu(x_ref, cmask_ref, rmask_ref, wf_ref, pwb_ref, out_ref, *,
                    KH, KW, pad, W, NB, Cin, Cout, mxu_bf16):
    """Large-channel path: depthwise fused into the pointwise on the MXU.

    wf_ref: (KH*KW, Cout, Cin) fused per-tap weights
            W_tap[o,c] = sum_m pw[o, c*kpl+m] * dw[c*kpl+m, tap]
    out = sum_dh row_mask_dh * roll( sum_dw W_{dh,dw} @ (col-masked rolled x) )
    """
    HWp = x_ref.shape[-1]
    x = x_ref[...].astype(jnp.float32)
    cmask = cmask_ref[...]
    rmask = rmask_ref[...]
    wf = wf_ref[...].astype(jnp.float32)
    pwb = pwb_ref[...].astype(jnp.float32)

    mm_dtype = jnp.bfloat16 if mxu_bf16 else jnp.float32
    xdw = [v.astype(mm_dtype) for v in _shifted_cols(x, cmask, KW, pad, HWp)]
    wf = wf.astype(mm_dtype)

    for nb in range(NB):
        acc = None
        for kh in range(KH):
            dh = kh - pad
            t_sum = None
            for kw in range(KW):
                t = kh * KW + kw
                xs = xdw[kw][nb * Cin:(nb + 1) * Cin, :]         # (Cin, HWp)
                p = jnp.dot(wf[t], xs, preferred_element_type=jnp.float32)
                t_sum = p if t_sum is None else t_sum + p        # (Cout, HWp)
            if dh != 0:
                t_sum = (pltpu.roll(t_sum, (-(dh * W)) % HWp, axis=1)
                         * rmask[kh:kh + 1, :])
            acc = t_sum if acc is None else acc + t_sum
        acc = acc + pwb
        out_ref[pl.ds(nb * Cout, Cout), :] = acc.astype(out_ref.dtype)


# --------------------------------------------------------------------------- #
# Wrapper (matches DepthwiseSeparableConv.forward, PyTorch NCHW / OIHW layouts)
# --------------------------------------------------------------------------- #
def depthwise_separable_conv(x_nchw, dw_w, dw_b, pw_w, pw_b, *,
                             padding=0, kernels_per_layer=1,
                             num_cores=None, mxu_bf16=False):
    """dw_w: (Cin*kpl, 1, K, K), dw_b: (Cin*kpl,),
       pw_w: (Cout, Cin*kpl, 1, 1), pw_b: (Cout,)."""
    N, Cin, H, W = x_nchw.shape
    Cmid, _, KH, KW = dw_w.shape
    Cout = pw_w.shape[0]
    kpl = kernels_per_layer
    assert Cmid == Cin * kpl and pw_w.shape[1] == Cmid

    Ho = H + 2 * padding - KH + 1
    Wo = W + 2 * padding - KW + 1
    # TODO(synk): padding larger than 'same' (output bigger than input) is not
    # supported by the flattened-lane formulation.
    assert 1 <= Ho <= H and 1 <= Wo <= W, "2*padding must be <= kernel_size-1"

    HW = H * W
    HWp = ((HW + 127) // 128) * 128          # lane-dense (unmasked) stores

    # ---- generation-aware grid: fold whole batch on single-TC chips ---------
    if num_cores is None:
        num_cores = _tensorcores_per_chip()
    NB = _pick_nb(N, num_cores, Cin, Cout)
    grid = (N // NB,)

    # ---- host-constant separable border masks (no per-step iota/compares) ---
    lane = np.arange(HWp)
    w_idx = lane % W
    h_idx = lane // W
    col_masks = np.ones((KW, HWp), np.float32)
    row_masks = np.ones((KH, HWp), np.float32)
    for kw in range(KW):
        dw = kw - padding
        m = np.ones(HWp, np.bool_)
        if dw > 0:
            m &= (w_idx < W - dw)
        if dw < 0:
            m &= (w_idx >= -dw)
        col_masks[kw] = m
    for kh in range(KH):
        dh = kh - padding
        m = np.ones(HWp, np.bool_)
        if dh > 0:
            m &= (h_idx < H - dh)
        if dh < 0:
            m &= (h_idx >= -dh)
        row_masks[kh] = m
    col_masks = jnp.asarray(col_masks)
    row_masks = jnp.asarray(row_masks)

    # ---- tiny weight re-organisation (activations are never transposed) -----
    dw_mat = dw_w.reshape(Cmid, KH * KW).astype(jnp.float32)
    pw_mat = pw_w.reshape(Cout, Cmid).astype(jnp.float32)
    # Fold the depthwise bias into the pointwise bias: pw@(conv+dwb)+pwb.
    pwb_eff = (pw_mat @ dw_b.reshape(Cmid, 1).astype(jnp.float32)
               + pw_b.reshape(Cout, 1).astype(jnp.float32))

    # ---- activations: free row-major reshape (+ lane pad only if needed) ----
    x_flat = x_nchw.reshape(N * Cin, HW)
    if HWp != HW:
        x_flat = jnp.pad(x_flat, ((0, 0), (0, HWp - HW)))

    use_mxu = (Cmid >= 16) or (Cmid * Cout >= 1024)

    common_specs = [
        pl.BlockSpec((NB * Cin, HWp), lambda b: (b, 0)),
        pl.BlockSpec((KW, HWp), lambda b: (0, 0)),
        pl.BlockSpec((KH, HWp), lambda b: (0, 0)),
    ]
    out_spec = pl.BlockSpec((NB * Cout, HWp), lambda b: (b, 0))
    out_shape = jax.ShapeDtypeStruct((N * Cout, HWp), x_nchw.dtype)

    if use_mxu:
        # Fused per-tap pointwise*depthwise weights (collapses kpl too).
        wf = pw_mat[None, :, :] * dw_mat.T[:, None, :]           # (T, Cout, Cmid)
        wf = wf.reshape(KH * KW, Cout, Cin, kpl).sum(-1)         # (T, Cout, Cin)
        kernel = functools.partial(_dsc_kernel_mxu, KH=KH, KW=KW, pad=padding,
                                   W=W, NB=NB, Cin=Cin, Cout=Cout,
                                   mxu_bf16=mxu_bf16)
        in_specs = common_specs + [
            pl.BlockSpec((KH * KW, Cout, Cin), lambda b: (0, 0, 0)),
            pl.BlockSpec((Cout, 1), lambda b: (0, 0)),
        ]
        args = (x_flat, col_masks, row_masks, wf, pwb_eff)
    else:
        dw_by_m = dw_mat.reshape(Cin, kpl, KH * KW).transpose(1, 0, 2)
        dw_tiled = jnp.tile(dw_by_m, (1, NB, 1))                 # (kpl, NB*Cin, T)
        pw_by_m = pw_mat.reshape(Cout, Cin, kpl).transpose(2, 0, 1)  # (kpl,Cout,Cin)
        kernel = functools.partial(_dsc_kernel_vpu, KH=KH, KW=KW, pad=padding,
                                   W=W, NB=NB, Cin=Cin, Cout=Cout, kpl=kpl)
        in_specs = common_specs + [
            pl.BlockSpec((kpl, NB * Cin, KH * KW), lambda b: (0, 0, 0)),
            pl.BlockSpec((kpl, Cout, Cin), lambda b: (0, 0, 0)),
            pl.BlockSpec((Cout, 1), lambda b: (0, 0)),
        ]
        args = (x_flat, col_masks, row_masks, dw_tiled, pw_by_m, pwb_eff)

    out_flat = pl.pallas_call(
        kernel,
        out_shape=out_shape,
        grid_spec=pltpu.PrefetchScalarGridSpec(
            num_scalar_prefetch=0, grid=grid,
            in_specs=in_specs, out_specs=out_spec),
        compiler_params=pltpu.CompilerParams(
            dimension_semantics=("parallel",),
            vmem_limit_bytes=_vmem_limit_bytes()),
    )(*args)

    if HWp != HW:
        out_flat = out_flat[:, :HW]
    out = out_flat.reshape(N, Cout, H, W)
    if (Ho, Wo) != (H, W):
        out = out[:, :, :Ho, :Wo]
    return out


# --------------------------------------------------------------------------- #
# Pure-JAX reference and self-checks
# --------------------------------------------------------------------------- #
def _ref_forward(x, dw_w, dw_b, pw_w, pw_b, *, padding):
    Cin = x.shape[1]
    y = jax.lax.conv_general_dilated(
        x, dw_w, (1, 1), [(padding, padding), (padding, padding)],
        dimension_numbers=('NCHW', 'OIHW', 'NCHW'),
        feature_group_count=Cin)
    y = y + dw_b.reshape(1, -1, 1, 1)
    z = jax.lax.conv_general_dilated(
        y, pw_w, (1, 1), 'VALID',
        dimension_numbers=('NCHW', 'OIHW', 'NCHW'))
    return z + pw_b.reshape(1, -1, 1, 1)


if __name__ == "__main__":
    def run_case(name, N, Cin, Cout, K, pad, kpl, H, W):
        Cmid = Cin * kpl
        key = jax.random.PRNGKey(0)
        kx, k1, k2, k3, k4 = jax.random.split(key, 5)
        x = jax.random.normal(kx, (N, Cin, H, W), dtype=jnp.float32)
        dw_w = jax.random.normal(k1, (Cmid, 1, K, K), dtype=jnp.float32) * 0.1
        dw_b = jax.random.normal(k2, (Cmid,), dtype=jnp.float32) * 0.1
        pw_w = jax.random.normal(k3, (Cout, Cmid, 1, 1), dtype=jnp.float32) * 0.1
        pw_b = jax.random.normal(k4, (Cout,), dtype=jnp.float32) * 0.1

        out = depthwise_separable_conv(x, dw_w, dw_b, pw_w, pw_b,
                                       padding=pad, kernels_per_layer=kpl)
        out = jax.block_until_ready(out)
        ref = _ref_forward(x, dw_w, dw_b, pw_w, pw_b, padding=pad)
        Ho, Wo = H + 2 * pad - K + 1, W + 2 * pad - K + 1
        assert out.shape == (N, Cout, Ho, Wo), (name, out.shape)
        err = float(jnp.max(jnp.abs(out - ref)))
        assert jnp.allclose(out, ref, atol=1e-4, rtol=1e-4), (name, err)

    # Spec config: in_channels=4, output_channels=8, kernel_size=3, padding=1.
    run_case("vpu_3x3", N=2, Cin=4, Cout=8, K=3, pad=1, kpl=1, H=16, W=16)
    # MXU-fused path + kernels_per_layer>1 + non-pow2 W + lane-padded H*W.
    run_case("mxu_kpl2", N=2, Cin=8, Cout=16, K=3, pad=1, kpl=2, H=12, W=12)
    # VPU path with kpl>1, 5x5 taps and output trimming (padding < 'same').
    run_case("vpu_5x5_trim", N=1, Cin=4, Cout=8, K=5, pad=1, kpl=2, H=16, W=16)

    print("KERNEL_OK")
</pallas_src>

<mosaic_0001>
module attributes {stable_mosaic.version = 11 : i64} {
  func.func @_dsc_kernel_vpu(%arg0: i32, %arg1: memref<8x256xf32, #tpu.memory_space<vmem>>, %arg2: memref<3x256xf32, #tpu.memory_space<vmem>>, %arg3: memref<3x256xf32, #tpu.memory_space<vmem>>, %arg4: memref<1x8x9xf32, #tpu.memory_space<vmem>>, %arg5: memref<1x8x4xf32, #tpu.memory_space<vmem>>, %arg6: memref<8x1xf32, #tpu.memory_space<vmem>>, %arg7: memref<16x256xf32, #tpu.memory_space<vmem>>) attributes {dimension_semantics = [#tpu.dimension_semantics<parallel>], iteration_bounds = array<i64: 1>, scalar_prefetch = 0 : i64, scratch_operands = 0 : i64, tpu.core_type = #tpu.core_type<tc>, window_params = [{transform_indices = @transform_0, window_bounds = array<i64: 8, 256>}, {pipeline_mode = #tpu.pipeline_mode<synchronous>, transform_indices = @transform_1, window_bounds = array<i64: 3, 256>}, {pipeline_mode = #tpu.pipeline_mode<synchronous>, transform_indices = @transform_2, window_bounds = array<i64: 3, 256>}, {pipeline_mode = #tpu.pipeline_mode<synchronous>, transform_indices = @transform_3, window_bounds = array<i64: 1, 8, 9>}, {pipeline_mode = #tpu.pipeline_mode<synchronous>, transform_indices = @transform_4, window_bounds = array<i64: 1, 8, 4>}, {pipeline_mode = #tpu.pipeline_mode<synchronous>, transform_indices = @transform_5, window_bounds = array<i64: 8, 1>}, {transform_indices = @transform_6, window_bounds = array<i64: 16, 256>}]} {
    %c0 = arith.constant 0 : index
    %c0_0 = arith.constant 0 : index
    %0 = vector.load %arg1[%c0, %c0_0] : memref<8x256xf32, #tpu.memory_space<vmem>>, vector<8x256xf32>
    %c0_1 = arith.constant 0 : index
    %c0_2 = arith.constant 0 : index
    %1 = vector.load %arg2[%c0_1, %c0_2] : memref<3x256xf32, #tpu.memory_space<vmem>>, vector<3x256xf32>
    %c0_3 = arith.constant 0 : index
    %c0_4 = arith.constant 0 : index
    %2 = vector.load %arg3[%c0_3, %c0_4] : memref<3x256xf32, #tpu.memory_space<vmem>>, vector<3x256xf32>
    %c0_5 = arith.constant 0 : index
    %c0_6 = arith.constant 0 : index
    %c0_7 = arith.constant 0 : index
    %3 = vector.load %arg4[%c0_5, %c0_6, %c0_7] : memref<1x8x9xf32, #tpu.memory_space<vmem>>, vector<1x8x9xf32>
    %c0_8 = arith.constant 0 : index
    %c0_9 = arith.constant 0 : index
    %c0_10 = arith.constant 0 : index
    %4 = vector.load %arg5[%c0_8, %c0_9, %c0_10] : memref<1x8x4xf32, #tpu.memory_space<vmem>>, vector<1x8x4xf32>
    %c0_11 = arith.constant 0 : index
    %c0_12 = arith.constant 0 : index
    %5 = vector.load %arg6[%c0_11, %c0_12] : memref<8x1xf32, #tpu.memory_space<vmem>>, vector<8x1xf32>
    %c1_i32 = arith.constant 1 : i32
    %6 = tpu.dynamic_rotate %0 by %c1_i32 dim 1 : vector<8x256xf32>, i32 -> vector<8x256xf32>
    %7 = vector.extract_strided_slice %1 {offsets = [0, 0], sizes = [1, 256], strides = [1, 1]} : vector<3x256xf32> to vector<1x256xf32>
    %8 = vector.broadcast %7 : vector<1x256xf32> to vector<8x256xf32>
    %9 = arith.mulf %6, %8 : vector<8x256xf32>
    %c255_i32 = arith.constant 255 : i32
    %10 = tpu.dynamic_rotate %0 by %c255_i32 dim 1 : vector<8x256xf32>, i32 -> vector<8x256xf32>
    %11 = vector.extract_strided_slice %1 {offsets = [2, 0], sizes = [1, 256], strides = [1, 1]} : vector<3x256xf32> to vector<1x256xf32>
    %12 = vector.broadcast %11 : vector<1x256xf32> to vector<8x256xf32>
    %13 = arith.mulf %10, %12 : vector<8x256xf32>
    %14 = vector.extract_strided_slice %4 {offsets = [0, 0, 0], sizes = [1, 8, 1], strides = [1, 1, 1]} : vector<1x8x4xf32> to vector<1x8x1xf32>
    %15 = vector.shape_cast %14 : vector<1x8x1xf32> to vector<8x1xf32>
    %16 = vector.extract_strided_slice %4 {offsets = [0, 0, 1], sizes = [1, 8, 1], strides = [1, 1, 1]} : vector<1x8x4xf32> to vector<1x8x1xf32>
    %17 = vector.shape_cast %16 : vector<1x8x1xf32> to vector<8x1xf32>
    %18 = vector.extract_strided_slice %4 {offsets = [0, 0, 2], sizes = [1, 8, 1], strides = [1, 1, 1]} : vector<1x8x4xf32> to vector<1x8x1xf32>
    %19 = vector.shape_cast %18 : vector<1x8x1xf32> to vector<8x1xf32>
    %20 = vector.extract_strided_slice %4 {offsets = [0, 0, 3], sizes = [1, 8, 1], strides = [1, 1, 1]} : vector<1x8x4xf32> to vector<1x8x1xf32>
    %21 = vector.shape_cast %20 : vector<1x8x1xf32> to vector<8x1xf32>
    %22 = vector.extract_strided_slice %3 {offsets = [0, 0, 0], sizes = [1, 8, 1], strides = [1, 1, 1]} : vector<1x8x9xf32> to vector<1x8x1xf32>
    %23 = vector.shape_cast %22 : vector<1x8x1xf32> to vector<8x1xf32>
    %24 = vector.broadcast %23 : vector<8x1xf32> to vector<8x256xf32>
    %25 = arith.mulf %24, %9 : vector<8x256xf32>
    %26 = vector.extract_strided_slice %3 {offsets = [0, 0, 1], sizes = [1, 8, 1], strides = [1, 1, 1]} : vector<1x8x9xf32> to vector<1x8x1xf32>
    %27 = vector.shape_cast %26 : vector<1x8x1xf32> to vector<8x1xf32>
    %28 = vector.broadcast %27 : vector<8x1xf32> to vector<8x256xf32>
    %29 = arith.mulf %28, %0 : vector<8x256xf32>
    %30 = arith.addf %25, %29 : vector<8x256xf32>
    %31 = vector.extract_strided_slice %3 {offsets = [0, 0, 2], sizes = [1, 8, 1], strides = [1, 1, 1]} : vector<1x8x9xf32> to vector<1x8x1xf32>
    %32 = vector.shape_cast %31 : vector<1x8x1xf32> to vector<8x1xf32>
    %33 = vector.broadcast %32 : vector<8x1xf32> to vector<8x256xf32>
    %34 = arith.mulf %33, %13 : vector<8x256xf32>
    %35 = arith.addf %30, %34 : vector<8x256xf32>
    %c16_i32 = arith.constant 16 : i32
    %36 = tpu.dynamic_rotate %35 by %c16_i32 dim 1 : vector<8x256xf32>, i32 -> vector<8x256xf32>
    %37 = vector.extract_strided_slice %2 {offsets = [0, 0], sizes = [1, 256], strides = [1, 1]} : vector<3x256xf32> to vector<1x256xf32>
    %38 = vector.broadcast %37 : vector<1x256xf32> to vector<8x256xf32>
    %39 = arith.mulf %36, %38 : vector<8x256xf32>
    %40 = vector.extract_strided_slice %3 {offsets = [0, 0, 3], sizes = [1, 8, 1], strides = [1, 1, 1]} : vector<1x8x9xf32> to vector<1x8x1xf32>
    %41 = vector.shape_cast %40 : vector<1x8x1xf32> to vector<8x1xf32>
    %42 = vector.broadcast %41 : vector<8x1xf32> to vector<8x256xf32>
    %43 = arith.mulf %42, %9 : vector<8x256xf32>
    %44 = vector.extract_strided_slice %3 {offsets = [0, 0, 4], sizes = [1, 8, 1], strides = [1, 1, 1]} : vector<1x8x9xf32> to vector<1x8x1xf32>
    %45 = vector.shape_cast %44 : vector<1x8x1xf32> to vector<8x1xf32>
    %46 = vector.broadcast %45 : vector<8x1xf32> to vector<8x256xf32>
    %47 = arith.mulf %46, %0 : vector<8x256xf32>
    %48 = arith.addf %43, %47 : vector<8x256xf32>
    %49 = vector.extract_strided_slice %3 {offsets = [0, 0, 5], sizes = [1, 8, 1], strides = [1, 1, 1]} : vector<1x8x9xf32> to vector<1x8x1xf32>
    %50 = vector.shape_cast %49 : vector<1x8x1xf32> to vector<8x1xf32>
    %51 = vector.broadcast %50 : vector<8x1xf32> to vector<8x256xf32>
    %52 = arith.mulf %51, %13 : vector<8x256xf32>
    %53 = arith.addf %48, %52 : vector<8x256xf32>
    %54 = arith.addf %39, %53 : vector<8x256xf32>
    %55 = vector.extract_strided_slice %3 {offsets = [0, 0, 6], sizes = [1, 8, 1], strides = [1, 1, 1]} : vector<1x8x9xf32> to vector<1x8x1xf32>
    %56 = vector.shape_cast %55 : vector<1x8x1xf32> to vector<8x1xf32>
    %57 = vector.broadcast %56 : vector<8x1xf32> to vector<8x256xf32>
    %58 = arith.mulf %57, %9 : vector<8x256xf32>
    %59 = vector.extract_strided_slice %3 {offsets = [0, 0, 7], sizes = [1, 8, 1], strides = [1, 1, 1]} : vector<1x8x9xf32> to vector<1x8x1xf32>
    %60 = vector.shape_cast %59 : vector<1x8x1xf32> to vector<8x1xf32>
    %61 = vector.broadcast %60 : vector<8x1xf32> to vector<8x256xf32>
    %62 = arith.mulf %61, %0 : vector<8x256xf32>
    %63 = arith.addf %58, %62 : vector<8x256xf32>
    %64 = vector.extract_strided_slice %3 {offsets = [0, 0, 8], sizes = [1, 8, 1], strides = [1, 1, 1]} : vector<1x8x9xf32> to vector<1x8x1xf32>
    %65 = vector.shape_cast %64 : vector<1x8x1xf32> to vector<8x1xf32>
    %66 = vector.broadcast %65 : vector<8x1xf32> to vector<8x256xf32>
    %67 = arith.mulf %66, %13 : vector<8x256xf32>
    %68 = arith.addf %63, %67 : vector<8x256xf32>
    %c240_i32 = arith.constant 240 : i32
    %69 = tpu.dynamic_rotate %68 by %c240_i32 dim 1 : vector<8x256xf32>, i32 -> vector<8x256xf32>
    %70 = vector.extract_strided_slice %2 {offsets = [2, 0], sizes = [1, 256], strides = [1, 1]} : vector<3x256xf32> to vector<1x256xf32>
    %71 = vector.broadcast %70 : vector<1x256xf32> to vector<8x256xf32>
    %72 = arith.mulf %69, %71 : vector<8x256xf32>
    %73 = arith.addf %54, %72 : vector<8x256xf32>
    %74 = vector.extract_strided_slice %73 {offsets = [0, 0], sizes = [1, 256], strides = [1, 1]} : vector<8x256xf32> to vector<1x256xf32>
    %75 = vector.broadcast %15 : vector<8x1xf32> to vector<8x256xf32>
    %76 = vector.broadcast %74 : vector<1x256xf32> to vector<8x256xf32>
    %77 = arith.mulf %75, %76 : vector<8x256xf32>
    %78 = vector.extract_strided_slice %73 {offsets = [1, 0], sizes = [1, 256], strides = [1, 1]} : vector<8x256xf32> to vector<1x256xf32>
    %79 = vector.broadcast %17 : vector<8x1xf32> to vector<8x256xf32>
    %80 = vector.broadcast %78 : vector<1x256xf32> to vector<8x256xf32>
    %81 = arith.mulf %79, %80 : vector<8x256xf32>
    %82 = arith.addf %77, %81 : vector<8x256xf32>
    %83 = vector.extract_strided_slice %73 {offsets = [2, 0], sizes = [1, 256], strides = [1, 1]} : vector<8x256xf32> to vector<1x256xf32>
    %84 = vector.broadcast %19 : vector<8x1xf32> to vector<8x256xf32>
    %85 = vector.broadcast %83 : vector<1x256xf32> to vector<8x256xf32>
    %86 = arith.mulf %84, %85 : vector<8x256xf32>
    %87 = arith.addf %82, %86 : vector<8x256xf32>
    %88 = vector.extract_strided_slice %73 {offsets = [3, 0], sizes = [1, 256], strides = [1, 1]} : vector<8x256xf32> to vector<1x256xf32>
    %89 = vector.broadcast %21 : vector<8x1xf32> to vector<8x256xf32>
    %90 = vector.broadcast %88 : vector<1x256xf32> to vector<8x256xf32>
    %91 = arith.mulf %89, %90 : vector<8x256xf32>
    %92 = arith.addf %87, %91 : vector<8x256xf32>
    %93 = vector.broadcast %5 : vector<8x1xf32> to vector<8x256xf32>
    %94 = arith.addf %92, %93 : vector<8x256xf32>
    %c0_13 = arith.constant 0 : index
    %c0_14 = arith.constant 0 : index
    %95 = vector.load %arg7[%c0_13, %c0_14] : memref<16x256xf32, #tpu.memory_space<vmem>>, vector<8x256xf32>
    tpu.vector_store %arg7[%c0_13, %c0_14], %94 {strides = array<i32>} : memref<16x256xf32, #tpu.memory_space<vmem>>, vector<8x256xf32>,
    %96 = vector.extract_strided_slice %73 {offsets = [4, 0], sizes = [1, 256], strides = [1, 1]} : vector<8x256xf32> to vector<1x256xf32>
    %97 = vector.broadcast %15 : vector<8x1xf32> to vector<8x256xf32>
    %98 = vector.broadcast %96 : vector<1x256xf32> to vector<8x256xf32>
    %99 = arith.mulf %97, %98 : vector<8x256xf32>
    %100 = vector.extract_strided_slice %73 {offsets = [5, 0], sizes = [1, 256], strides = [1, 1]} : vector<8x256xf32> to vector<1x256xf32>
    %101 = vector.broadcast %17 : vector<8x1xf32> to vector<8x256xf32>
    %102 = vector.broadcast %100 : vector<1x256xf32> to vector<8x256xf32>
    %103 = arith.mulf %101, %102 : vector<8x256xf32>
    %104 = arith.addf %99, %103 : vector<8x256xf32>
    %105 = vector.extract_strided_slice %73 {offsets = [6, 0], sizes = [1, 256], strides = [1, 1]} : vector<8x256xf32> to vector<1x256xf32>
    %106 = vector.broadcast %19 : vector<8x1xf32> to vector<8x256xf32>
    %107 = vector.broadcast %105 : vector<1x256xf32> to vector<8x256xf32>
    %108 = arith.mulf %106, %107 : vector<8x256xf32>
    %109 = arith.addf %104, %108 : vector<8x256xf32>
    %110 = vector.extract_strided_slice %73 {offsets = [7, 0], sizes = [1, 256], strides = [1, 1]} : vector<8x256xf32> to vector<1x256xf32>
    %111 = vector.broadcast %21 : vector<8x1xf32> to vector<8x256xf32>
    %112 = vector.broadcast %110 : vector<1x256xf32> to vector<8x256xf32>
    %113 = arith.mulf %111, %112 : vector<8x256xf32>
    %114 = arith.addf %109, %113 : vector<8x256xf32>
    %115 = vector.broadcast %5 : vector<8x1xf32> to vector<8x256xf32>
    %116 = arith.addf %114, %115 : vector<8x256xf32>
    %c8 = arith.constant 8 : index
    %c0_15 = arith.constant 0 : index
    %117 = vector.load %arg7[%c8, %c0_15] : memref<16x256xf32, #tpu.memory_space<vmem>>, vector<8x256xf32>
    tpu.vector_store %arg7[%c8, %c0_15], %116 {strides = array<i32>} : memref<16x256xf32, #tpu.memory_space<vmem>>, vector<8x256xf32>,
    return
  }
  func.func @transform_0(%arg0: i32) -> (i32, i32) {
    %c0_i32 = arith.constant 0 : i32
    %c0_i32_0 = arith.constant 0 : i32
    return %arg0, %c0_i32 : i32, i32
  }
  func.func @transform_1(%arg0: i32) -> (i32, i32) {
    %c0_i32 = arith.constant 0 : i32
    %c0_i32_0 = arith.constant 0 : i32
    %c0_i32_1 = arith.constant 0 : i32
    return %c0_i32, %c0_i32_0 : i32, i32
  }
  func.func @transform_2(%arg0: i32) -> (i32, i32) {
    %c0_i32 = arith.constant 0 : i32
    %c0_i32_0 = arith.constant 0 : i32
    %c0_i32_1 = arith.constant 0 : i32
    return %c0_i32, %c0_i32_0 : i32, i32
  }
  func.func @transform_3(%arg0: i32) -> (i32, i32, i32) {
    %c0_i32 = arith.constant 0 : i32
    %c0_i32_0 = arith.constant 0 : i32
    %c0_i32_1 = arith.constant 0 : i32
    %c0_i32_2 = arith.constant 0 : i32
    return %c0_i32, %c0_i32_0, %c0_i32_1 : i32, i32, i32
  }
  func.func @transform_4(%arg0: i32) -> (i32, i32, i32) {
    %c0_i32 = arith.constant 0 : i32
    %c0_i32_0 = arith.constant 0 : i32
    %c0_i32_1 = arith.constant 0 : i32
    %c0_i32_2 = arith.constant 0 : i32
    return %c0_i32, %c0_i32_0, %c0_i32_1 : i32, i32, i32
  }
  func.func @transform_5(%arg0: i32) -> (i32, i32) {
    %c0_i32 = arith.constant 0 : i32
    %c0_i32_0 = arith.constant 0 : i32
    %c0_i32_1 = arith.constant 0 : i32
    return %c0_i32, %c0_i32_0 : i32, i32
  }
  func.func @transform_6(%arg0: i32) -> (i32, i32) {
    %c0_i32 = arith.constant 0 : i32
    %c0_i32_0 = arith.constant 0 : i32
    return %arg0, %c0_i32 : i32, i32
  }
}

</mosaic_0001>

<llo_original>
// kernel: tpu_custom_call.1
$region0: #{tpu_custom_call.1}
  #allocation0 [shape = 'u32[]', space=smem, size = 0x4, offset = 0x4, fixed_abs, tag = 'smem constant byte address 0x4 - core index']
  #allocation1 [shape = 'u32[144,128]{1,0:T(1,128)}', space=vmem, size = 0x12000, scoped, tag = 'internal scratch']
  %s0 = inlined_call_operand.vmem [shape: f32[8,256], index: 0, kind: input, shape index: {}]
  %s1 = inlined_call_operand.hbm [shape: f32[3,256], index: 1, kind: input, shape index: {}]
  %s2 = inlined_call_operand.vmem [shape: f32[3,256], index: 2, kind: input, shape index: {}]
  %s3 = inlined_call_operand.hbm [shape: f32[1,8,9], index: 3, kind: input, shape index: {}]
  %s4 = inlined_call_operand.vmem [shape: f32[1,8,4], index: 4, kind: input, shape index: {}]
  %s5 = inlined_call_operand.vmem [shape: f32[8,1], index: 5, kind: input, shape index: {}]
  %s6 = inlined_call_operand.hbm [shape: f32[16,256], index: 6, kind: output, shape index: {}]
  %s7 = sld [smem:[#allocation0]]
  $region42: #{tpu_custom_call.1} parent=0
    _
  %s9 = ssub.s32 1, %s7
  %s10 = scalar_select 0, %s9, %s7
  $region1: #{tpu_custom_call.1} parent=0
    #allocation2 [shape = 'u8[4096]{0}', space=vmem, size = 0x1000, scoped, tag = 'input window, operand 1, single buffered']
    #allocation3 [shape = 's32[1]{0}', space=sflag, size = 0x4, scoped, tag = 'scoped memory for tpu_custom_call.1']
    #allocation4 [shape = 's32[1]{0}', space=sflag, size = 0x4, scoped, tag = 'scoped memory for tpu_custom_call.1']
    #allocation5 [shape = 'u8[4096]{0}', space=vmem, size = 0x1000, scoped, tag = 'input window, operand 3, single buffered']
    #allocation6 [shape = 's32[1]{0}', space=sflag, size = 0x4, scoped, tag = 'scoped memory for tpu_custom_call.1']
    #allocation7 [shape = 'u8[16384]{0}', space=vmem, size = 0x4000, scoped, tag = 'output window, operand 0, single buffered']
    %11 = vsyncpa [#allocation3], 0
    %12 = vsyncpa [#allocation6], 0
    %13 = vsyncpa [#allocation4], 0
    // Predicated region
    $region2: #{tpu_custom_call.1} parent=1 // pred_check
      _
    $region3: #{tpu_custom_call.1} parent=1 // pred_check_branch
      %15 = sbr.rel (0) target = $region5
    $region4: #{tpu_custom_call.1} parent=1 // pred_region
      _
    $region5: #{tpu_custom_call.1} parent=1 // pred_fallthru
      _
    // Predicated region
    $region6: #{tpu_custom_call.1} parent=1 // pred_check
      _
    $region7: #{tpu_custom_call.1} parent=1 // pred_check_branch
      %17 = sbr.rel (0) target = $region9
    $region8: #{tpu_custom_call.1} parent=1 // pred_region
      %s19 = ssub.s32 128, 128
      %20 = vsyncadd [#allocation3], %s19
      %s22 = sshll.u32 [#allocation2], 4
      %s23 = int_to_ptr.vmem [resolvable:$true] %s22
      %25 = dma.hbm_to_vmem [thread:$0]  %s1, 128, %s23, [#allocation3]
    $region9: #{tpu_custom_call.1} parent=1 // pred_fallthru
      _
    // Predicated region
    $region10: #{tpu_custom_call.1} parent=1 // pred_check
      _
    $region11: #{tpu_custom_call.1} parent=1 // pred_check_branch
      %27 = sbr.rel (0) target = $region13
    $region12: #{tpu_custom_call.1} parent=1 // pred_region
      _
    $region13: #{tpu_custom_call.1} parent=1 // pred_fallthru
      _
    // Predicated region
    $region14: #{tpu_custom_call.1} parent=1 // pred_check
      _
    $region15: #{tpu_custom_call.1} parent=1 // pred_check_branch
      %29 = sbr.rel (0) target = $region17
    $region16: #{tpu_custom_call.1} parent=1 // pred_region
      %s31 = ssub.s32 128, 128
      %32 = vsyncadd [#allocation6], %s31
      %s34 = sshll.u32 [#allocation5], 4
      %s35 = int_to_ptr.vmem [resolvable:$true] %s34
      %37 = dma.hbm_to_vmem [thread:$0]  %s3, 128, %s35, [#allocation6]
    $region17: #{tpu_custom_call.1} parent=1 // pred_fallthru
      _
    // Predicated region
    $region18: #{tpu_custom_call.1} parent=1 // pred_check
      _
    $region19: #{tpu_custom_call.1} parent=1 // pred_check_branch
      %39 = sbr.rel (0) target = $region21
    $region20: #{tpu_custom_call.1} parent=1 // pred_region
      _
    $region21: #{tpu_custom_call.1} parent=1 // pred_fallthru
      _
    // Predicated region
    $region22: #{tpu_custom_call.1} parent=1 // pred_check
      _
    $region23: #{tpu_custom_call.1} parent=1 // pred_check_branch
      %41 = sbr.rel (0) target = $region25
    $region24: #{tpu_custom_call.1} parent=1 // pred_region
      _
    $region25: #{tpu_custom_call.1} parent=1 // pred_fallthru
      _
    // Predicated region
    $region26: #{tpu_custom_call.1} parent=1 // pred_check
      _
    $region27: #{tpu_custom_call.1} parent=1 // pred_check_branch
      %43 = sbr.rel (0) target = $region29
    $region28: #{tpu_custom_call.1} parent=1 // pred_region
      %44 = dma.done [#allocation3], 128
    $region29: #{tpu_custom_call.1} parent=1 // pred_fallthru
      _
    // Predicated region
    $region30: #{tpu_custom_call.1} parent=1 // pred_check
      _
    $region31: #{tpu_custom_call.1} parent=1 // pred_check_branch
      %46 = sbr.rel (0) target = $region33
    $region32: #{tpu_custom_call.1} parent=1 // pred_region
      %47 = dma.done [#allocation6], 128
    $region33: #{tpu_custom_call.1} parent=1 // pred_fallthru
      _
    %v48 = vld [vmem:[%s0] sm:$0xff]
    %v49 = vld [vmem:[%s0 + $0x8] sm:$0xff]
    %v50 = vld [vmem:[#allocation2] sm:$0x77]
    %v51 = vld [vmem:[%s2] sm:$0x77]
    %v52 = vld [vmem:[#allocation5] sm:$0xff]
    %v53 = vld [vmem:[%s4] sm:$0xff]
    %v54 = vld [vmem:[%s5] sm:$0xff]
    %55 = vrot.lane.b32.xlu0 %v48, 1
    %v56 = vpop.permute.xlu0 %55
    %57 = vrot.lane.b32.xlu0 %v49, 1
    %v58 = vpop.permute.xlu0 %57
    %v59 = vlaneseq
    %v60 = vand.u32 %v59, 127
    %vm61 = vcmp.lt.s32.totalorder %v60, 1
    %v62 = vsel %vm61, %v56, %v58
    %v63 = vsel %vm61, %v58, %v56
    %v65 = vlaneseq
    %v66 = vshrl.u32 %v65, 7
    %v67 = vsub.s32 0, %v66
    %v68 = vrot.slane %v50, %v67
    %v69 = vlaneseq
    %v70 = vshrl.u32 %v69, 7
    %v71 = vsub.s32 4, %v70
    %v72 = vrot.slane %v50, %v71
    %v75 = vlaneseq
    %v76 = vshrl.u32 %v75, 7
    %v77 = vsub.s32 0, %v76
    %v78 = vrot.slane %v68, %v77
    %v79 = vlaneseq
    %v80 = vshrl.u32 %v79, 7
    %v81 = vsub.s32 0, %v80
    %v82 = vrot.slane %v72, %v81
    %v83 = vmul.f32 %v63, %v78
    %v84 = vmul.f32 %v62, %v82
    %85 = vrot.lane.b32.xlu0 %v48, 127
    %v86 = vpop.permute.xlu0 %85
    %87 = vrot.lane.b32.xlu0 %v49, 127
    %v88 = vpop.permute.xlu0 %87
    %vm89 = vcmp.lt.s32.totalorder %v60, 127
    %v90 = vsel %vm89, %v86, %v88
    %v91 = vsel %vm89, %v88, %v86
    %v92 = vlaneseq
    %v93 = vshrl.u32 %v92, 7
    %v94 = vsub.s32 2, %v93
    %v95 = vrot.slane %v50, %v94
    %v96 = vlaneseq
    %v97 = vshrl.u32 %v96, 7
    %v98 = vsub.s32 6, %v97
    %v99 = vrot.slane %v50, %v98
    %v102 = vlaneseq
    %v103 = vshrl.u32 %v102, 7
    %v104 = vsub.s32 2, %v103
    %v105 = vrot.slane %v95, %v104
    %v106 = vlaneseq
    %v107 = vshrl.u32 %v106, 7
    %v108 = vsub.s32 2, %v107
    %v109 = vrot.slane %v99, %v108
    %v110 = vmul.f32 %v90, %v105
    %v111 = vmul.f32 %v91, %v109
    %113 = vset.pattern.permute.xlu0 0
    %114 = vperm.xlu0 %113, %v52
    %v115 = vpop.permute.xlu0 %114
    %v117 = vmul.f32 %v115, %v83
    %v118 = vmul.f32 %v115, %v84
    %119 = vset.pattern.permute.xlu0 1
    %120 = vperm.xlu0 %119, %v52
    %v121 = vpop.permute.xlu0 %120
    %v123 = vmul.f32 %v121, %v48
    %v124 = vmul.f32 %v121, %v49
    %v125 = vadd.f32 %v117, %v123
    %v126 = vadd.f32 %v118, %v124
    %127 = vset.pattern.permute.xlu0 2
    %128 = vperm.xlu0 %127, %v52
    %v129 = vpop.permute.xlu0 %128
    %v131 = vmul.f32 %v129, %v110
    %v132 = vmul.f32 %v129, %v111
    %v133 = vadd.f32 %v125, %v131
    %v134 = vadd.f32 %v126, %v132
    %135 = vrot.lane.b32.xlu0 %v133, 16
    %v136 = vpop.permute.xlu0 %135
    %137 = vrot.lane.b32.xlu0 %v134, 16
    %v138 = vpop.permute.xlu0 %137
    %vm139 = vcmp.lt.s32.totalorder %v60, 16
    %v140 = vsel %vm139, %v136, %v138
    %v141 = vsel %vm139, %v138, %v136
    %v143 = vlaneseq
    %v144 = vshrl.u32 %v143, 7
    %v145 = vsub.s32 0, %v144
    %v146 = vrot.slane %v51, %v145
    %v147 = vlaneseq
    %v148 = vshrl.u32 %v147, 7
    %v149 = vsub.s32 4, %v148
    %v150 = vrot.slane %v51, %v149
    %v153 = vlaneseq
    %v154 = vshrl.u32 %v153, 7
    %v155 = vsub.s32 0, %v154
    %v156 = vrot.slane %v146, %v155
    %v157 = vlaneseq
    %v158 = vshrl.u32 %v157, 7
    %v159 = vsub.s32 0, %v158
    %v160 = vrot.slane %v150, %v159
    %v161 = vmul.f32 %v141, %v156
    %v162 = vmul.f32 %v140, %v160
    %163 = vset.pattern.permute.xlu0 3
    %164 = vperm.xlu0 %163, %v52
    %v165 = vpop.permute.xlu0 %164
    %v167 = vmul.f32 %v165, %v83
    %v168 = vmul.f32 %v165, %v84
    %169 = vset.pattern.permute.xlu0 4
    %170 = vperm.xlu0 %169, %v52
    %v171 = vpop.permute.xlu0 %170
    %v173 = vmul.f32 %v171, %v48
    %v174 = vmul.f32 %v171, %v49
    %v175 = vadd.f32 %v167, %v173
    %v176 = vadd.f32 %v168, %v174
    %177 = vset.pattern.permute.xlu0 5
    %178 = vperm.xlu0 %177, %v52
    %v179 = vpop.permute.xlu0 %178
    %v181 = vmul.f32 %v179, %v110
    %v182 = vmul.f32 %v179, %v111
    %v183 = vadd.f32 %v175, %v181
    %v184 = vadd.f32 %v176, %v182
    %v185 = vadd.f32 %v161, %v183
    %v186 = vadd.f32 %v162, %v184
    %187 = vset.pattern.permute.xlu0 6
    %188 = vperm.xlu0 %187, %v52
    %v189 = vpop.permute.xlu0 %188
    %v191 = vmul.f32 %v189, %v83
    %v192 = vmul.f32 %v189, %v84
    %193 = vset.pattern.permute.xlu0 7
    %194 = vperm.xlu0 %193, %v52
    %v195 = vpop.permute.xlu0 %194
    %v197 = vmul.f32 %v195, %v48
    %v198 = vmul.f32 %v195, %v49
    %v199 = vadd.f32 %v191, %v197
    %v200 = vadd.f32 %v192, %v198
    %201 = vset.pattern.permute.xlu0 8
    %202 = vperm.xlu0 %201, %v52
    %v203 = vpop.permute.xlu0 %202
    %v205 = vmul.f32 %v203, %v110
    %v206 = vmul.f32 %v203, %v111
    %v207 = vadd.f32 %v199, %v205
    %v208 = vadd.f32 %v200, %v206
    %209 = vrot.lane.b32.xlu0 %v207, 112
    %v210 = vpop.permute.xlu0 %209
    %211 = vrot.lane.b32.xlu0 %v208, 112
    %v212 = vpop.permute.xlu0 %211
    %vm213 = vcmp.lt.s32.totalorder %v60, 112
    %v214 = vsel %vm213, %v210, %v212
    %v215 = vsel %vm213, %v212, %v210
    %v216 = vlaneseq
    %v217 = vshrl.u32 %v216, 7
    %v218 = vsub.s32 2, %v217
    %v219 = vrot.slane %v51, %v218
    %v220 = vlaneseq
    %v221 = vshrl.u32 %v220, 7
    %v222 = vsub.s32 6, %v221
    %v223 = vrot.slane %v51, %v222
    %v226 = vlaneseq
    %v227 = vshrl.u32 %v226, 7
    %v228 = vsub.s32 2, %v227
    %v229 = vrot.slane %v219, %v228
    %v230 = vlaneseq
    %v231 = vshrl.u32 %v230, 7
    %v232 = vsub.s32 2, %v231
    %v233 = vrot.slane %v223, %v232
    %v234 = vmul.f32 %v214, %v229
    %v235 = vmul.f32 %v215, %v233
    %v236 = vadd.f32 %v185, %v234
    %v237 = vadd.f32 %v186, %v235
    %239 = vset.pattern.permute.xlu0 0
    %240 = vperm.xlu0 %239, %v53
    %v241 = vpop.permute.xlu0 %240
    %v243 = vlaneseq
    %v244 = vshrl.u32 %v243, 7
    %v245 = vsub.s32 0, %v244
    %v246 = vrot.slane %v236, %v245
    %v247 = vlaneseq
    %v248 = vshrl.u32 %v247, 7
    %v249 = vsub.s32 0, %v248
    %v250 = vrot.slane %v237, %v249
    %v251 = vmul.f32 %v241, %v246
    %v252 = vmul.f32 %v241, %v250
    %253 = vset.pattern.permute.xlu0 1
    %254 = vperm.xlu0 %253, %v53
    %v255 = vpop.permute.xlu0 %254
    %v257 = vlaneseq
    %v258 = vshrl.u32 %v257, 7
    %v259 = vsub.s32 1, %v258
    %v260 = vrot.slane %v236, %v259
    %v261 = vlaneseq
    %v262 = vshrl.u32 %v261, 7
    %v263 = vsub.s32 1, %v262
    %v264 = vrot.slane %v237, %v263
    %v265 = vmul.f32 %v255, %v260
    %v266 = vmul.f32 %v255, %v264
    %v267 = vadd.f32 %v251, %v265
    %v268 = vadd.f32 %v252, %v266
    %269 = vset.pattern.permute.xlu0 2
    %270 = vperm.xlu0 %269, %v53
    %v271 = vpop.permute.xlu0 %270
    %v273 = vlaneseq
    %v274 = vshrl.u32 %v273, 7
    %v275 = vsub.s32 2, %v274
    %v276 = vrot.slane %v236, %v275
    %v277 = vlaneseq
    %v278 = vshrl.u32 %v277, 7
    %v279 = vsub.s32 2, %v278
    %v280 = vrot.slane %v237, %v279
    %v281 = vmul.f32 %v271, %v276
    %v282 = vmul.f32 %v271, %v280
    %v283 = vadd.f32 %v267, %v281
    %v284 = vadd.f32 %v268, %v282
    %285 = vset.pattern.permute.xlu0 3
    %286 = vperm.xlu0 %285, %v53
    %v287 = vpop.permute.xlu0 %286
    %v289 = vlaneseq
    %v290 = vshrl.u32 %v289, 7
    %v291 = vsub.s32 3, %v290
    %v292 = vrot.slane %v236, %v291
    %v293 = vlaneseq
    %v294 = vshrl.u32 %v293, 7
    %v295 = vsub.s32 3, %v294
    %v296 = vrot.slane %v237, %v295
    %v297 = vmul.f32 %v287, %v292
    %v298 = vmul.f32 %v287, %v296
    %v299 = vadd.f32 %v283, %v297
    %v300 = vadd.f32 %v284, %v298
    %302 = vset.pattern.permute.xlu0 0
    %303 = vperm.xlu0 %302, %v54
    %v304 = vpop.permute.xlu0 %303
    %v306 = vadd.f32 %v299, %v304
    %v307 = vadd.f32 %v300, %v304
    %308 = vst [vmem:[#allocation7] sm:$0xff] %v306
    %309 = vst [vmem:[#allocation7 + $0x8] sm:$0xff] %v307
    %v310 = vlaneseq
    %v311 = vshrl.u32 %v310, 7
    %v312 = vsub.s32 4, %v311
    %v313 = vrot.slane %v236, %v312
    %v314 = vlaneseq
    %v315 = vshrl.u32 %v314, 7
    %v316 = vsub.s32 4, %v315
    %v317 = vrot.slane %v237, %v316
    %v318 = vmul.f32 %v241, %v313
    %v319 = vmul.f32 %v241, %v317
    %v320 = vlaneseq
    %v321 = vshrl.u32 %v320, 7
    %v322 = vsub.s32 5, %v321
    %v323 = vrot.slane %v236, %v322
    %v324 = vlaneseq
    %v325 = vshrl.u32 %v324, 7
    %v326 = vsub.s32 5, %v325
    %v327 = vrot.slane %v237, %v326
    %v328 = vmul.f32 %v255, %v323
    %v329 = vmul.f32 %v255, %v327
    %v330 = vadd.f32 %v318, %v328
    %v331 = vadd.f32 %v319, %v329
    %v332 = vlaneseq
    %v333 = vshrl.u32 %v332, 7
    %v334 = vsub.s32 6, %v333
    %v335 = vrot.slane %v236, %v334
    %v336 = vlaneseq
    %v337 = vshrl.u32 %v336, 7
    %v338 = vsub.s32 6, %v337
    %v339 = vrot.slane %v237, %v338
    %v340 = vmul.f32 %v271, %v335
    %v341 = vmul.f32 %v271, %v339
    %v342 = vadd.f32 %v330, %v340
    %v343 = vadd.f32 %v331, %v341
    %v344 = vlaneseq
    %v345 = vshrl.u32 %v344, 7
    %v346 = vsub.s32 7, %v345
    %v347 = vrot.slane %v236, %v346
    %v348 = vlaneseq
    %v349 = vshrl.u32 %v348, 7
    %v350 = vsub.s32 7, %v349
    %v351 = vrot.slane %v237, %v350
    %v352 = vmul.f32 %v287, %v347
    %v353 = vmul.f32 %v287, %v351
    %v354 = vadd.f32 %v342, %v352
    %v355 = vadd.f32 %v343, %v353
    %v356 = vadd.f32 %v354, %v304
    %v357 = vadd.f32 %v355, %v304
    %358 = vst [vmem:[#allocation7 + $0x10] sm:$0xff] %v356
    %359 = vst [vmem:[#allocation7 + $0x18] sm:$0xff] %v357
    // Predicated region
    $region34: #{tpu_custom_call.1} parent=1 // pred_check
      _
    $region35: #{tpu_custom_call.1} parent=1 // pred_check_branch
      %361 = sbr.rel (0) target = $region37
    $region36: #{tpu_custom_call.1} parent=1 // pred_region
      %s363 = ssub.s32 512, 512
      %364 = vsyncadd [#allocation4], %s363
      %s365 = sshll.u32 [#allocation7], 4
      %s366 = int_to_ptr.vmem [resolvable:$true] %s365
      %371 = dma.vmem_to_hbm [thread:$0]  %s366, 512, %s6, [#allocation4], 256, 256, 16
    $region37: #{tpu_custom_call.1} parent=1 // pred_fallthru
      _
    // Predicated region
    $region38: #{tpu_custom_call.1} parent=1 // pred_check
      _
    $region39: #{tpu_custom_call.1} parent=1 // pred_check_branch
      %373 = sbr.rel (0) target = $region41
    $region40: #{tpu_custom_call.1} parent=1 // pred_region
      %374 = dma.done [#allocation4], 512
    $region41: #{tpu_custom_call.1} parent=1 // pred_fallthru
      _
    %375 = vsyncpa [#allocation3], 1
    %376 = vsyncpa [#allocation6], 1
    %377 = vsyncpa [#allocation4], 1

</llo_original>
